<compile_context>
chip_gen: v6e
topology: v6e:2x2x1
jax: 0.10.0
libtpu: 0.0.40
codegen_flags: <defaults>
</compile_context>

<pallas_src>
import jax
import jax.numpy as jnp
from jax.experimental import pallas as pl
from jax.experimental.pallas import tpu as pltpu


PARM_EMB_SIZE = 64
PARM_FEATURE_SIZE = 200
PARM_WORD_SIZE = 5


def _patch_embed_kernel(x_ref, wt_ref, add_ref, o_ref):
    # x_ref:   (Fp, 2W)   row-pair-packed input rows for one batch element
    # wt_ref:  (2W, 2E)   block-diagonal (transposed) projection weight
    # add_ref: (Fp, 2E)   row-pair-packed additive table (bias+flag+pos, row0, pad)
    # o_ref:   (Fp, 2E)   row-pair-packed output (full 128-lane unmasked stores)
    proj = jnp.dot(x_ref[...], wt_ref[...], preferred_element_type=jnp.float32)
    o_ref[...] = (proj + add_ref[...]).astype(o_ref.dtype)


def prepare_params(w_proj, b_proj, sla_token, positions, flag_weight, row_flags):
    """One-time parameter prep (hoisted out of the per-call path).

    Returns:
      wt2:        (2W, 2E) block-diagonal transposed projection weight.
      add_packed: (Fp, 2E) row-pair-packed additive table with
                  row 0 = sla_token + positions[0],
                  rows 1..F = b_proj + flag_embed(row_flags) + positions[1:F+1],
                  trailing pad row = 0.
    """
    E, W = w_proj.shape
    F = row_flags.shape[0]
    Fpad = F + 1 + ((F + 1) % 2)          # even row count (202 for F=200)
    Fp = Fpad // 2

    # Block-diagonal weight so one matmul serves both packed rows.
    wt = w_proj.T.astype(jnp.float32)                      # (W, E)
    wt2 = jnp.zeros((2 * W, 2 * E), jnp.float32)
    wt2 = wt2.at[:W, :E].set(wt).at[W:, E:].set(wt)        # (2W, 2E)

    # Additive table covering ALL output rows (row 0 folded in, tail padded).
    row0 = (sla_token.reshape(E) + positions[0]).astype(jnp.float32)        # (E,)
    body = (b_proj[None, :] + flag_weight[row_flags]
            + positions[1:F + 1]).astype(jnp.float32)                       # (F, E)
    pad = jnp.zeros((Fpad - (F + 1), E), jnp.float32)
    additive = jnp.concatenate([row0[None, :], body, pad], axis=0)          # (Fpad, E)
    add_packed = additive.reshape(Fp, 2 * E)               # pure row-major reshape
    return wt2, add_packed


@jax.jit
def net_patch_embedding_fwd(x, wt2, add_packed):
    """x: (B, F, W) float32 -> (B, F+1, E) float32."""
    B, F, W = x.shape
    Fp, twoE = add_packed.shape
    E = twoE // 2
    Fpad = 2 * Fp

    # Prepend a zero row (row 0 gets no projection term) + pad tail to even
    # row count, then pack row pairs along the lane axis — pure reshape.
    x_full = jnp.pad(x, ((0, 0), (1, Fpad - F - 1), (0, 0)))   # (B, Fpad, W)
    x_packed = x_full.reshape(B, Fp, 2 * W)                    # (B, Fp, 2W)

    grid_spec = pltpu.PrefetchScalarGridSpec(
        num_scalar_prefetch=0,
        grid=(B,),
        in_specs=[
            pl.BlockSpec((None, Fp, 2 * W), lambda b: (b, 0, 0)),  # per-batch x
            pl.BlockSpec((2 * W, 2 * E), lambda b: (0, 0)),        # weight (resident)
            pl.BlockSpec((Fp, 2 * E), lambda b: (0, 0)),           # additive (resident)
        ],
        out_specs=pl.BlockSpec((None, Fp, 2 * E), lambda b: (b, 0, 0)),
    )

    out_packed = pl.pallas_call(
        _patch_embed_kernel,
        out_shape=jax.ShapeDtypeStruct((B, Fp, 2 * E), jnp.float32),
        grid_spec=grid_spec,
        compiler_params=pltpu.CompilerParams(
            dimension_semantics=("parallel",)),
    )(x_packed, wt2, add_packed)

    # Unpack row pairs (pure reshape) and drop the single pad row.
    out = out_packed.reshape(B, Fpad, E)[:, :F + 1]
    return out


def net_patch_embedding(x, w_proj, b_proj, sla_token, positions, flag_weight,
                        row_flags):
    """Convenience wrapper matching the original call signature."""
    wt2, add_packed = prepare_params(w_proj, b_proj, sla_token, positions,
                                     flag_weight, row_flags)
    return net_patch_embedding_fwd(x, wt2, add_packed)


def reference(x, w_proj, b_proj, sla_token, positions, flag_weight, row_flags):
    B, F, W = x.shape
    E = w_proj.shape[0]
    x_lin = jnp.einsum("bfw,ew->bfe", x, w_proj) + b_proj
    flag_emb = flag_weight[row_flags]
    x_out = x_lin + flag_emb[None]
    sla = jnp.broadcast_to(sla_token.reshape(1, 1, E), (B, 1, E))
    x_out = jnp.concatenate([sla, x_out], axis=1)
    return x_out + positions[None, :F + 1, :]


if __name__ == "__main__":
    B = 2
    F = PARM_FEATURE_SIZE   # 200
    W = PARM_WORD_SIZE      # 5
    E = PARM_EMB_SIZE       # 64

    key = jax.random.PRNGKey(0)
    kx, kw, kb, ks, kp, kf = jax.random.split(key, 6)

    x = jax.random.normal(kx, (B, F, W), dtype=jnp.float32)

    # Deterministic synthetic parameters (shapes from nn.Module __init__).
    w_proj = jax.random.normal(kw, (E, W), dtype=jnp.float32) * 0.1   # Linear.weight
    b_proj = jax.random.normal(kb, (E,), dtype=jnp.float32) * 0.1     # Linear.bias
    sla_token = jax.random.normal(ks, (1, 1, E), dtype=jnp.float32)   # sla_token
    positions = jax.random.normal(kp, (F + 1, E), dtype=jnp.float32)  # positions
    flag_weight = jax.random.normal(kf, (2, E), dtype=jnp.float32)    # Embedding(2, E)
    row_flags = jnp.array([0] * (F - 4) + [1] * 4, dtype=jnp.int32)   # buffer

    # One-time parameter prep (hoisted out of the per-call path).
    wt2, add_packed = prepare_params(w_proj, b_proj, sla_token, positions,
                                     flag_weight, row_flags)

    out = net_patch_embedding_fwd(x, wt2, add_packed)
    out = jax.block_until_ready(out)

    ref = reference(x, w_proj, b_proj, sla_token, positions, flag_weight,
                    row_flags)
    assert out.shape == (B, F + 1, E)
    assert jnp.allclose(out, ref, atol=1e-4, rtol=1e-4)

    print("KERNEL_OK")
</pallas_src>

<mosaic_0001>
module attributes {stable_mosaic.version = 11 : i64} {
  func.func @_patch_embed_kernel(%arg0: i32, %arg1: memref<1x101x10xf32, #tpu.memory_space<vmem>>, %arg2: memref<10x128xf32, #tpu.memory_space<vmem>>, %arg3: memref<101x128xf32, #tpu.memory_space<vmem>>, %arg4: memref<1x101x128xf32, #tpu.memory_space<vmem>>) attributes {dimension_semantics = [#tpu.dimension_semantics<parallel>], iteration_bounds = array<i64: 2>, scalar_prefetch = 0 : i64, scratch_operands = 0 : i64, tpu.core_type = #tpu.core_type<tc>, window_params = [{transform_indices = @transform_0, window_bounds = array<i64: 1, 101, 10>}, {pipeline_mode = #tpu.pipeline_mode<synchronous>, transform_indices = @transform_1, window_bounds = array<i64: 10, 128>}, {pipeline_mode = #tpu.pipeline_mode<synchronous>, transform_indices = @transform_2, window_bounds = array<i64: 101, 128>}, {transform_indices = @transform_3, window_bounds = array<i64: 1, 101, 128>}]} {
    %c0 = arith.constant 0 : index
    %c0_0 = arith.constant 0 : index
    %c0_1 = arith.constant 0 : index
    %0 = vector.load %arg1[%c0, %c0_0, %c0_1] : memref<1x101x10xf32, #tpu.memory_space<vmem>>, vector<1x101x10xf32>
    %1 = vector.shape_cast %0 : vector<1x101x10xf32> to vector<101x10xf32>
    %c0_2 = arith.constant 0 : index
    %c0_3 = arith.constant 0 : index
    %2 = vector.load %arg2[%c0_2, %c0_3] : memref<10x128xf32, #tpu.memory_space<vmem>>, vector<10x128xf32>
    %cst = arith.constant dense<0.000000e+00> : vector<101x128xf32>
    %3 = tpu.matmul %1, %2, %cst {dimension_numbers = #tpu.dot_dimension_numbers<[1], [0], [0], [1], [0, 0, 1, 1], [], []>} : vector<101x10xf32>, vector<10x128xf32>, vector<101x128xf32> -> vector<101x128xf32>
    %c0_4 = arith.constant 0 : index
    %c0_5 = arith.constant 0 : index
    %4 = vector.load %arg3[%c0_4, %c0_5] : memref<101x128xf32, #tpu.memory_space<vmem>>, vector<101x128xf32>
    %5 = arith.addf %3, %4 : vector<101x128xf32>
    %c0_6 = arith.constant 0 : index
    %c0_7 = arith.constant 0 : index
    %c0_8 = arith.constant 0 : index
    %6 = vector.load %arg4[%c0_6, %c0_7, %c0_8] : memref<1x101x128xf32, #tpu.memory_space<vmem>>, vector<1x101x128xf32>
    %7 = vector.shape_cast %6 : vector<1x101x128xf32> to vector<101x128xf32>
    %8 = vector.shape_cast %5 : vector<101x128xf32> to vector<1x101x128xf32>
    tpu.vector_store %arg4[%c0_6, %c0_7, %c0_8], %8 {strides = array<i32>} : memref<1x101x128xf32, #tpu.memory_space<vmem>>, vector<1x101x128xf32>,
    return
  }
  func.func @transform_0(%arg0: i32) -> (i32, i32, i32) {
    %c0_i32 = arith.constant 0 : i32
    %c0_i32_0 = arith.constant 0 : i32
    %c0_i32_1 = arith.constant 0 : i32
    return %arg0, %c0_i32, %c0_i32_0 : i32, i32, i32
  }
  func.func @transform_1(%arg0: i32) -> (i32, i32) {
    %c0_i32 = arith.constant 0 : i32
    %c0_i32_0 = arith.constant 0 : i32
    %c0_i32_1 = arith.constant 0 : i32
    return %c0_i32, %c0_i32_0 : i32, i32
  }
  func.func @transform_2(%arg0: i32) -> (i32, i32) {
    %c0_i32 = arith.constant 0 : i32
    %c0_i32_0 = arith.constant 0 : i32
    %c0_i32_1 = arith.constant 0 : i32
    return %c0_i32, %c0_i32_0 : i32, i32
  }
  func.func @transform_3(%arg0: i32) -> (i32, i32, i32) {
    %c0_i32 = arith.constant 0 : i32
    %c0_i32_0 = arith.constant 0 : i32
    %c0_i32_1 = arith.constant 0 : i32
    return %arg0, %c0_i32, %c0_i32_0 : i32, i32, i32
  }
}

</mosaic_0001>

<llo_original>
// kernel: net_patch_embedding_fwd.1
$region0: #{net_patch_embedding_fwd.1}
  #allocation0 [shape = 'u32[]', space=smem, size = 0x4, offset = 0x4, fixed_abs, tag = 'smem constant byte address 0x4 - core index']
  #allocation1 [shape = 'u32[144,128]{1,0:T(1,128)}', space=vmem, size = 0x12000, scoped, tag = 'internal scratch']
  %s0 = inlined_call_operand.vmem [shape: f32[2,101,10], index: 0, kind: input, shape index: {}]
  %s1 = inlined_call_operand.vmem [shape: f32[10,128], index: 1, kind: input, shape index: {}]
  %s2 = inlined_call_operand.vmem [shape: f32[101,128], index: 2, kind: input, shape index: {}]
  %s3 = inlined_call_operand.vmem [shape: f32[2,101,128], index: 3, kind: output, shape index: {}]
  %s4 = sld [smem:[#allocation0]]
  $region45: #{net_patch_embedding_fwd.1} parent=0
    _
  %s6 = ssub.s32 1, %s4
  %s7 = scalar_select 0, %s6, %s4
  loop: start=0, step=1, limit=4
  $region2: #{net_patch_embedding_fwd.1} parent=0 // loop_pre_header
    _
  $region3: #{net_patch_embedding_fwd.1} parent=0 // loop_header
    %s9 = sphi 0, %s13
    %p10 = scmp.ge.s32.totalorder %s9, 4
    %s19 = sphi 0, %s21
    %s22 = sphi 0, %s19
    %s23 = sphi 0, %s22
    %s39 = sphi 0, %s23
    %s43 = sphi 0, %s43
    %s45 = sphi 0, %s43
    %s46 = sphi 0, %s45
    %s60 = sphi 0, %s46
    %s64 = sphi 0, %s64
    %s66 = sphi 0, %s64
    %s67 = sphi 0, %s66
    %s81 = sphi 0, %s67
    %s87 = sphi 0, %s89
    %s90 = sphi 0, %s87
    %s91 = sphi 0, %s90
    %s107 = sphi 0, %s91
  $region4: #{net_patch_embedding_fwd.1} parent=0 // loop_header_branch
    %12 = sbr.rel (%p10) target = $region8
  $region5: #{net_patch_embedding_fwd.1} parent=0 // loop_body
    %s14 = ssub.s32 %s9, 1
    %s15 = ssub.s32 %s9, 2
    %s16 = sadd.s32 %s9, 1
    %s17 = ssub.s32 %s9, %s16
    %p18 = scmp.eq.s32.totalorder %s17, 0
    %s20 = sadd.s32 %s19, 1
    %s21 = scalar_select %p18, %s19, %s20
    %p24 = pneg %p18
    %p25 = scmp.eq.s32.totalorder %s9, 1
    %p26 = por %p24, %p25
    %p27 = scmp.ne.s32.totalorder %s19, %s22
    %p28 = scmp.eq.s32.totalorder %s9, 0
    %p29 = por %p27, %p28
    %p30 = scmp.ne.s32.totalorder %s19, %s22
    %p31 = scmp.eq.s32.totalorder %s14, 1
    %p32 = por %p30, %p31
    %p33 = scmp.ne.s32.totalorder %s22, %s23
    %p34 = scmp.eq.s32.totalorder %s14, 0
    %p35 = por %p33, %p34
    %p36 = scmp.ne.s32.totalorder %s22, %s23
    %p37 = scmp.eq.s32.totalorder %s15, 1
    %p38 = por %p36, %p37
    %p40 = scmp.ne.s32.totalorder %s23, %s39
    %p41 = scmp.eq.s32.totalorder %s15, 0
    %p42 = por %p40, %p41
    %s44 = sadd.s32 %s43, 1
    %p47 = scmp.eq.s32.totalorder %s9, 1
    %p48 = scmp.ne.s32.totalorder %s43, %s45
    %p49 = scmp.eq.s32.totalorder %s9, 0
    %p50 = por %p48, %p49
    %p51 = scmp.ne.s32.totalorder %s43, %s45
    %p52 = scmp.eq.s32.totalorder %s14, 1
    %p53 = por %p51, %p52
    %p54 = scmp.ne.s32.totalorder %s45, %s46
    %p55 = scmp.eq.s32.totalorder %s14, 0
    %p56 = por %p54, %p55
    %p57 = scmp.ne.s32.totalorder %s45, %s46
    %p58 = scmp.eq.s32.totalorder %s15, 1
    %p59 = por %p57, %p58
    %p61 = scmp.ne.s32.totalorder %s46, %s60
    %p62 = scmp.eq.s32.totalorder %s15, 0
    %p63 = por %p61, %p62
    %s65 = sadd.s32 %s64, 1
    %p68 = scmp.eq.s32.totalorder %s9, 1
    %p69 = scmp.ne.s32.totalorder %s64, %s66
    %p70 = scmp.eq.s32.totalorder %s9, 0
    %p71 = por %p69, %p70
    %p72 = scmp.ne.s32.totalorder %s64, %s66
    %p73 = scmp.eq.s32.totalorder %s14, 1
    %p74 = por %p72, %p73
    %p75 = scmp.ne.s32.totalorder %s66, %s67
    %p76 = scmp.eq.s32.totalorder %s14, 0
    %p77 = por %p75, %p76
    %p78 = scmp.ne.s32.totalorder %s66, %s67
    %p79 = scmp.eq.s32.totalorder %s15, 1
    %p80 = por %p78, %p79
    %p82 = scmp.ne.s32.totalorder %s67, %s81
    %p83 = scmp.eq.s32.totalorder %s15, 0
    %p84 = por %p82, %p83
    %s85 = ssub.s32 %s9, %s16
    %p86 = scmp.eq.s32.totalorder %s85, 0
    %s88 = sadd.s32 %s87, 1
    %s89 = scalar_select %p86, %s87, %s88
    %p92 = pneg %p86
    %p93 = scmp.eq.s32.totalorder %s9, 1
    %p94 = por %p92, %p93
    %p95 = scmp.ne.s32.totalorder %s87, %s90
    %p96 = scmp.eq.s32.totalorder %s9, 0
    %p97 = por %p95, %p96
    %p98 = scmp.ne.s32.totalorder %s87, %s90
    %p99 = scmp.eq.s32.totalorder %s14, 1
    %p100 = por %p98, %p99
    %p101 = scmp.ne.s32.totalorder %s90, %s91
    %p102 = scmp.eq.s32.totalorder %s14, 0
    %p103 = por %p101, %p102
    %p104 = scmp.ne.s32.totalorder %s90, %s91
    %p105 = scmp.eq.s32.totalorder %s15, 1
    %p106 = por %p104, %p105
    %p108 = scmp.ne.s32.totalorder %s91, %s107
    %p109 = scmp.eq.s32.totalorder %s15, 0
    %p110 = por %p108, %p109
    %p111 = scmp.le.s32.totalorder 1, %s9
    %p112 = scmp.lt.s32.totalorder %s9, 3
    %p113 = pnand %p111, %p112
    %p114 = pneg %p113
    // Predicated region
    $region9: #{net_patch_embedding_fwd.1} parent=5 // pred_check
      _
    $region10: #{net_patch_embedding_fwd.1} parent=5 // pred_check_branch
      %116 = sbr.rel (%p113) target = $region12
    $region11: #{net_patch_embedding_fwd.1} parent=5 // pred_region
      %s117 = ssub.s32 %s9, 1
      // Predicated region
      $region13: #{net_patch_embedding_fwd.1} parent=11 // pred_check
        %p118 = pneg %p56
      $region14: #{net_patch_embedding_fwd.1} parent=11 // pred_check_branch
        %120 = sbr.rel (%p118) target = $region16
      $region15: #{net_patch_embedding_fwd.1} parent=11 // pred_region
        _
      $region16: #{net_patch_embedding_fwd.1} parent=11 // pred_fallthru
        _
      // Predicated region
      $region17: #{net_patch_embedding_fwd.1} parent=11 // pred_check
        %p121 = pneg %p77
      $region18: #{net_patch_embedding_fwd.1} parent=11 // pred_check_branch
        %123 = sbr.rel (%p121) target = $region20
      $region19: #{net_patch_embedding_fwd.1} parent=11 // pred_region
        _
      $region20: #{net_patch_embedding_fwd.1} parent=11 // pred_fallthru
        _
    $region12: #{net_patch_embedding_fwd.1} parent=5 // pred_fallthru
      _
    %p124 = scmp.lt.s32.totalorder %s9, 2
    // Predicated region
    $region21: #{net_patch_embedding_fwd.1} parent=5 // pred_check
      %p125 = pneg %p124
    $region22: #{net_patch_embedding_fwd.1} parent=5 // pred_check_branch
      %127 = sbr.rel (%p125) target = $region24
    $region23: #{net_patch_embedding_fwd.1} parent=5 // pred_region
      // Predicated region
      $region25: #{net_patch_embedding_fwd.1} parent=23 // pred_check
        %p128 = pneg %p29
      $region26: #{net_patch_embedding_fwd.1} parent=23 // pred_check_branch
        %130 = sbr.rel (%p128) target = $region28
      $region27: #{net_patch_embedding_fwd.1} parent=23 // pred_region
        %p131 = scmp.lt.s32.totalorder %s9, 1
        %s132 = scalar_select %p131, %s9, 1
        %s133 = smul.addr %s132, 13
        %s134 = smul.addr %s133, 8
        %s135 = scalar_lea.vmem %s0, %s134
      $region28: #{net_patch_embedding_fwd.1} parent=23 // pred_fallthru
        _
    $region24: #{net_patch_embedding_fwd.1} parent=5 // pred_fallthru
      _
    %p136 = scmp.le.s32.totalorder 1, %s9
    %p137 = scmp.lt.s32.totalorder %s9, 3
    %p138 = pnand %p136, %p137
    %p139 = pneg %p138
    // Predicated region
    $region29: #{net_patch_embedding_fwd.1} parent=5 // pred_check
      _
    $region30: #{net_patch_embedding_fwd.1} parent=5 // pred_check_branch
      %141 = sbr.rel (%p138) target = $region32
    $region31: #{net_patch_embedding_fwd.1} parent=5 // pred_region
      %s142 = ssub.s32 %s9, 1
      %p143 = scmp.lt.s32.totalorder %s14, 1
      %s144 = scalar_select %p143, %s14, 1
      %s145 = smul.addr %s144, 13
      %s146 = smul.addr %s145, 8
      %s147 = scalar_lea.vmem %s0, %s146
      %p148 = pneg %p35
      %p149 = pneg %p32
      %p150 = pneg %p56
      %p151 = pneg %p53
      %p152 = pneg %p77
      %p153 = pneg %p74
      %p154 = pneg %p103
      %p155 = pneg %p100
      %p156 = scmp.lt.s32.totalorder %s14, 1
      %s157 = scalar_select %p156, %s14, 1
      %s158 = smul.addr %s157, 13
      %s159 = smul.addr %s158, 8
      %s160 = scalar_lea.vmem %s3, %s159
      %p161 = scmp.lt.s32.totalorder %s14, 1
      %s162 = scalar_select %p161, %s14, 1
      %s163 = smul.addr %s162, 13
      %s164 = smul.addr %s163, 8
      %s165 = scalar_lea.vmem %s0, %s164
      %p166 = scmp.lt.s32.totalorder %s14, 1
      %s167 = scalar_select %p166, %s14, 1
      %s168 = smul.addr %s167, 13
      %s169 = smul.addr %s168, 8
      %s170 = scalar_lea.vmem %s3, %s169
      %v171 = vld [vmem:[%s165] sm:$0xff]
      %v172 = vld [vmem:[%s165 + $0x8] sm:$0xff]
      %v173 = vld [vmem:[%s165 + $0x10] sm:$0xff]
      %v174 = vld [vmem:[%s165 + $0x18] sm:$0xff]
      %v175 = vld [vmem:[%s165 + $0x20] sm:$0xff]
      %v176 = vld [vmem:[%s165 + $0x28] sm:$0xff]
      %v177 = vld [vmem:[%s165 + $0x30] sm:$0xff]
      %v178 = vld [vmem:[%s165 + $0x38] sm:$0xff]
      %v179 = vld [vmem:[%s165 + $0x40] sm:$0xff]
      %v180 = vld [vmem:[%s165 + $0x48] sm:$0xff]
      %v181 = vld [vmem:[%s165 + $0x50] sm:$0xff]
      %v182 = vld [vmem:[%s165 + $0x58] sm:$0xff]
      %v183 = vld [vmem:[%s165 + $0x60] sm:$0x1f]
      %v184 = vld [vmem:[%s1] sm:$0xff]
      %v185 = vld [vmem:[%s1 + $0x8] sm:$0x3]
      %v186 = vld [vmem:[%s2] sm:$0xff]
      %v187 = vld [vmem:[%s2 + $0x8] sm:$0xff]
      %v188 = vld [vmem:[%s2 + $0x10] sm:$0xff]
      %v189 = vld [vmem:[%s2 + $0x18] sm:$0xff]
      %v190 = vld [vmem:[%s2 + $0x20] sm:$0xff]
      %v191 = vld [vmem:[%s2 + $0x28] sm:$0xff]
      %v192 = vld [vmem:[%s2 + $0x30] sm:$0xff]
      %v193 = vld [vmem:[%s2 + $0x38] sm:$0xff]
      %v194 = vld [vmem:[%s2 + $0x40] sm:$0xff]
      %v195 = vld [vmem:[%s2 + $0x48] sm:$0xff]
      %v196 = vld [vmem:[%s2 + $0x50] sm:$0xff]
      %v197 = vld [vmem:[%s2 + $0x58] sm:$0xff]
      %v198 = vld [vmem:[%s2 + $0x60] sm:$0x1f]
      %vm199 = vcmask 80896
      %v201 = vsel %vm199, %v171, 0
      %v204 = vsel %vm199, %v172, 0
      %v207 = vsel %vm199, %v173, 0
      %v210 = vsel %vm199, %v174, 0
      %v213 = vsel %vm199, %v175, 0
      %v216 = vsel %vm199, %v176, 0
      %v219 = vsel %vm199, %v177, 0
      %v222 = vsel %vm199, %v178, 0
      %v225 = vsel %vm199, %v179, 0
      %v228 = vsel %vm199, %v180, 0
      %v231 = vsel %vm199, %v181, 0
      %v234 = vsel %vm199, %v182, 0
      %v237 = vsel %vm199, %v183, 0
      %vm239 = vcmask 1041408
      %v241 = vsel %vm239, %v185, 0
      %243 = vmatprep.subr.mxu0 0.0
      %244 = vmatpush1.msra.mxu0 0.0
      %245 = vmatprep.subr.mxu0 0.0
      %246 = vmatpush1.msra.mxu0 0.0
      %247 = vmatprep.subr.mxu0 0.0
      %248 = vmatpush1.msra.mxu0 0.0
      %249 = vmatprep.subr.mxu0 0.0
      %250 = vmatpush1.msra.mxu0 0.0
      %251 = vmatprep.subr.mxu0 0.0
      %252 = vmatpush1.msra.mxu0 0.0
      %253 = vmatprep.subr.mxu0 0.0
      %254 = vmatpush1.msra.mxu0 0.0
      %255 = vmatprep.subr.mxu0 0.0
      %256 = vmatpush1.msra.mxu0 0.0
      %257 = vmatprep.subr.mxu0 0.0
      %258 = vmatpush1.msra.mxu0 0.0
      %259 = vmatprep.subr.mxu0 0.0
      %260 = vmatpush1.msra.mxu0 0.0
      %261 = vmatprep.subr.mxu0 0.0
      %262 = vmatpush1.msra.mxu0 0.0
      %263 = vmatprep.subr.mxu0 0.0
      %264 = vmatpush1.msra.mxu0 0.0
      %265 = vmatprep.subr.mxu0 0.0
      %266 = vmatpush1.msra.mxu0 0.0
      %267 = vmatprep.subr.mxu0 0.0
      %268 = vmatpush1.msra.mxu0 0.0
      %269 = vmatprep.subr.mxu0 0.0
      %270 = vmatpush1.msra.mxu0 0.0
      %271 = vmatprep.subr.mxu0 0.0
      %272 = vmatpush1.msra.mxu0 %v241
      %273 = vmatprep.subr.mxu0 0.0
      %274 = vmatpush1.msra.mxu0 %v184
      %275 = vmatprep.subr.mxu0 0.0
      %276 = vmatpush2.msra.mxu0 0.0
      %277 = vmatprep.subr.mxu0 0.0
      %278 = vmatpush2.msra.mxu0 0.0
      %279 = vmatprep.subr.mxu0 0.0
      %280 = vmatpush2.msra.mxu0 0.0
      %281 = vmatprep.subr.mxu0 0.0
      %282 = vmatpush2.msra.mxu0 0.0
      %283 = vmatprep.subr.mxu0 0.0
      %284 = vmatpush2.msra.mxu0 0.0
      %285 = vmatprep.subr.mxu0 0.0
      %286 = vmatpush2.msra.mxu0 0.0
      %287 = vmatprep.subr.mxu0 0.0
      %288 = vmatpush2.msra.mxu0 0.0
      %289 = vmatprep.subr.mxu0 0.0
      %290 = vmatpush2.msra.mxu0 0.0
      %291 = vmatprep.subr.mxu0 0.0
      %292 = vmatpush2.msra.mxu0 0.0
      %293 = vmatprep.subr.mxu0 0.0
      %294 = vmatpush2.msra.mxu0 0.0
      %295 = vmatprep.subr.mxu0 0.0
      %296 = vmatpush2.msra.mxu0 0.0
      %297 = vmatprep.subr.mxu0 0.0
      %298 = vmatpush2.msra.mxu0 0.0
      %299 = vmatprep.subr.mxu0 0.0
      %300 = vmatpush2.msra.mxu0 0.0
      %301 = vmatprep.subr.mxu0 0.0
      %302 = vmatpush2.msra.mxu0 0.0
      %303 = vmatprep.subr.mxu0 0.0
      %304 = vmatpush2.msra.mxu0 0.0
      %305 = vmatprep.subr.mxu0 0.0
      %306 = vmatpush2.msra.mxu0 0.0
      %307 = vmatprep.mubr.f32.mxu0 0.0
      %308 = vmatmul.mubr.f32.gmra.mxu0 %v201
      %v309 = vpop.f32.mrf.mxu0
      %v310 = vadd.f32 %v186, %v309
      %v311 = vpop.f32.mrf.mxu0
      %312 = vmatprep.mubr.f32.mxu0 0.0
      %313 = vmatmul.mubr.f32.gmra.mxu0 %v204
      %v314 = vpop.f32.mrf.mxu0
      %v315 = vadd.f32 %v187, %v314
      %v316 = vpop.f32.mrf.mxu0
      %317 = vmatprep.mubr.f32.mxu0 0.0
      %318 = vmatmul.mubr.f32.gmra.mxu0 %v207
      %v319 = vpop.f32.mrf.mxu0
      %v320 = vadd.f32 %v188, %v319
      %v321 = vpop.f32.mrf.mxu0
      %322 = vmatprep.mubr.f32.mxu0 0.0
      %323 = vmatmul.mubr.f32.gmra.mxu0 %v210
      %v324 = vpop.f32.mrf.mxu0
      %v325 = vadd.f32 %v189, %v324
      %v326 = vpop.f32.mrf.mxu0
      %327 = vmatprep.mubr.f32.mxu0 0.0
      %328 = vmatmul.mubr.f32.gmra.mxu0 %v213
      %v329 = vpop.f32.mrf.mxu0
      %v330 = vadd.f32 %v190, %v329
      %v331 = vpop.f32.mrf.mxu0
      %332 = vmatprep.mubr.f32.mxu0 0.0
      %333 = vmatmul.mubr.f32.gmra.mxu0 %v216
      %v334 = vpop.f32.mrf.mxu0
      %v335 = vadd.f32 %v191, %v334
      %v336 = vpop.f32.mrf.mxu0
      %337 = vmatprep.mubr.f32.mxu0 0.0
      %338 = vmatmul.mubr.f32.gmra.mxu0 %v219
      %v339 = vpop.f32.mrf.mxu0
      %v340 = vadd.f32 %v192, %v339
      %v341 = vpop.f32.mrf.mxu0
      %342 = vmatprep.mubr.f32.mxu0 0.0
      %343 = vmatmul.mubr.f32.gmra.mxu0 %v222
      %v344 = vpop.f32.mrf.mxu0
      %v345 = vadd.f32 %v193, %v344
      %v346 = vpop.f32.mrf.mxu0
      %347 = vmatprep.mubr.f32.mxu0 0.0
      %348 = vmatmul.mubr.f32.gmra.mxu0 %v225
      %v349 = vpop.f32.mrf.mxu0
      %v350 = vadd.f32 %v194, %v349
      %v351 = vpop.f32.mrf.mxu0
      %352 = vmatprep.mubr.f32.mxu0 0.0
      %353 = vmatmul.mubr.f32.gmra.mxu0 %v228
      %v354 = vpop.f32.mrf.mxu0
      %v355 = vadd.f32 %v195, %v354
      %v356 = vpop.f32.mrf.mxu0
      %357 = vmatprep.mubr.f32.mxu0 0.0
      %358 = vmatmul.mubr.f32.gmra.mxu0 %v231
      %v359 = vpop.f32.mrf.mxu0
      %v360 = vadd.f32 %v196, %v359
      %v361 = vpop.f32.mrf.mxu0
      %362 = vmatprep.mubr.f32.mxu0 0.0
      %363 = vmatmul.mubr.f32.gmra.mxu0 %v234
      %v364 = vpop.f32.mrf.mxu0
      %v365 = vadd.f32 %v197, %v364
      %v366 = vpop.f32.mrf.mxu0
      %367 = vmatprep.mubr.f32.mxu0 0.0
      %368 = vmatmul.mubr.f32.gmra.mxu0 %v237
      %v369 = vpop.f32.mrf.mxu0
      %v370 = vadd.f32 %v198, %v369
      %v371 = vpop.f32.mrf.mxu0
      %372 = vdwg.mxu0
      %373 = vst [vmem:[%s170] sm:$0xff] %v310
      %374 = vst [vmem:[%s170 + $0x8] sm:$0xff] %v315
      %375 = vst [vmem:[%s170 + $0x10] sm:$0xff] %v320
      %376 = vst [vmem:[%s170 + $0x18] sm:$0xff] %v325
      %377 = vst [vmem:[%s170 + $0x20] sm:$0xff] %v330
      %378 = vst [vmem:[%s170 + $0x28] sm:$0xff] %v335
      %379 = vst [vmem:[%s170 + $0x30] sm:$0xff] %v340
      %380 = vst [vmem:[%s170 + $0x38] sm:$0xff] %v345
      %381 = vst [vmem:[%s170 + $0x40] sm:$0xff] %v350
      %382 = vst [vmem:[%s170 + $0x48] sm:$0xff] %v355
      %383 = vst [vmem:[%s170 + $0x50] sm:$0xff] %v360
      %384 = vst [vmem:[%s170 + $0x58] sm:$0xff] %v365
      %385 = vst [vmem:[%s170 + $0x60] sm:$0x1f] %v370
      %p386 = scmp.lt.s32.totalorder %s14, 1
      %s387 = scalar_select %p386, %s14, 1
      %s388 = smul.addr %s387, 13
      %s389 = smul.addr %s388, 8
      %s390 = scalar_lea.vmem %s3, %s389
      // Predicated region
      $region33: #{net_patch_embedding_fwd.1} parent=31 // pred_check
        %p391 = pneg %p100
      $region34: #{net_patch_embedding_fwd.1} parent=31 // pred_check_branch
        %393 = sbr.rel (%p391) target = $region36
      $region35: #{net_patch_embedding_fwd.1} parent=31 // pred_region
        _
      $region36: #{net_patch_embedding_fwd.1} parent=31 // pred_fallthru
        _
    $region32: #{net_patch_embedding_fwd.1} parent=5 // pred_fallthru
      _
    %p394 = scmp.le.s32.totalorder 2, %s9
    // Predicated region
    $region37: #{net_patch_embedding_fwd.1} parent=5 // pred_check
      %p395 = pneg %p394
    $region38: #{net_patch_embedding_fwd.1} parent=5 // pred_check_branch
      %397 = sbr.rel (%p395) target = $region40
    $region39: #{net_patch_embedding_fwd.1} parent=5 // pred_region
      %s398 = ssub.s32 %s9, 2
      // Predicated region
      $region41: #{net_patch_embedding_fwd.1} parent=39 // pred_check
        %p399 = pneg %p106
      $region42: #{net_patch_embedding_fwd.1} parent=39 // pred_check_branch
        %401 = sbr.rel (%p399) target = $region44
      $region43: #{net_patch_embedding_fwd.1} parent=39 // pred_region
        %p402 = scmp.lt.s32.totalorder %s15, 1
        %s403 = scalar_select %p402, %s15, 1
        %s404 = smul.addr %s403, 13
        %s405 = smul.addr %s404, 8
        %s406 = scalar_lea.vmem %s3, %s405
      $region44: #{net_patch_embedding_fwd.1} parent=39 // pred_fallthru
        _
    $region40: #{net_patch_embedding_fwd.1} parent=5 // pred_fallthru
      _
  $region6: #{net_patch_embedding_fwd.1} parent=0 // loop_footer
    %s13 = sadd.s32 1, %s9
  $region7: #{net_patch_embedding_fwd.1} parent=0 // loop_footer_branch
    %8 = sbr.rel target = $region3
  $region8: #{net_patch_embedding_fwd.1} parent=0 // loop_exit
    _

</llo_original>
